<compile_context>
chip_gen: v5e
topology: v5e:2x2
jax: 0.10.0
libtpu: 0.0.40
codegen_flags: <defaults>
</compile_context>

<pallas_src>
import numpy as np
import jax
import jax.numpy as jnp
from jax.experimental import pallas as pl
from jax.experimental.pallas import tpu as pltpu


def _round_up(x, m):
    return ((x + m - 1) // m) * m


def _pick_tiles(M, K, N):
    """Choose (tm, tn, tk) and padded (Mp, Np, Kp) obeying (8, 128) tiling."""
    # M (sublane axis): multiple of 8, capped at 256; pad M to a tile multiple.
    Mp = _round_up(M, 8)
    tm = Mp if Mp <= 256 else 256
    Mp = _round_up(Mp, tm)

    # N (lane axis): pad to a multiple of 128, tile with the largest of
    # {512, 256, 128} that divides it (keeps stores lane-dense, padding small).
    Np = _round_up(N, 128)
    tn = next(t for t in (512, 256, 128) if Np % t == 0)

    # K (contraction): single block if small, else 128-multiple tiles.
    Kp = _round_up(K, 8)
    if Kp <= 512:
        tk = Kp
    else:
        Kp = _round_up(K, 128)
        tk = next(t for t in (512, 256, 128) if Kp % t == 0)

    return tm, tn, tk, Mp, Np, Kp


def _clinear_kernel(xr_ref, xi_ref, wr_ref, wi_ref, br_ref, bi_ref,
                    or_ref, oi_ref, accr_ref, acci_ref):
    k = pl.program_id(2)

    @pl.when(k == 0)
    def _():
        accr_ref[...] = jnp.zeros_like(accr_ref)
        acci_ref[...] = jnp.zeros_like(acci_ref)

    xr = xr_ref[...]
    xi = xi_ref[...]
    wr = wr_ref[...]
    wi = wi_ref[...]

    # 3 real MXU matmuls per K step (Karatsuba complex multiply); the operand
    # sums are cheap VPU adds on already-resident tiles.
    t1 = jnp.dot(xr, wr, preferred_element_type=jnp.float32)
    t2 = jnp.dot(xi, wi, preferred_element_type=jnp.float32)
    t3 = jnp.dot(xr + xi, wr + wi, preferred_element_type=jnp.float32)

    accr_ref[...] += t1 - t2
    acci_ref[...] += t3 - t1 - t2

    @pl.when(k == pl.num_programs(2) - 1)
    def _():
        or_ref[...] = accr_ref[...] + br_ref[...]
        oi_ref[...] = acci_ref[...] + bi_ref[...]


def _pad2(a, rows, cols):
    r, c = a.shape
    if r == rows and c == cols:
        return a
    return jnp.pad(a, ((0, rows - r), (0, cols - c)))


@jax.jit
def clinear_planes(xr, xi, wr, wi, br, bi):
    """Complex matmul on pre-split real/imag float32 planes.

    xr, xi: (M, K); wr, wi: (K, N); br, bi: (N,). Returns (out_r, out_i) f32.
    """
    M, K = xr.shape
    N = wr.shape[1]
    tm, tn, tk, Mp, Np, Kp = _pick_tiles(M, K, N)

    xr_p = _pad2(xr, Mp, Kp)
    xi_p = _pad2(xi, Mp, Kp)
    wr_p = _pad2(wr, Kp, Np)
    wi_p = _pad2(wi, Kp, Np)
    br_p = _pad2(br.reshape(1, N), 1, Np)
    bi_p = _pad2(bi.reshape(1, N), 1, Np)

    grid = (Mp // tm, Np // tn, Kp // tk)

    # Rough VMEM footprint: double-buffered x/w/out tiles (real+imag planes),
    # accumulator pair, bias rows. Raise the scoped limit only when needed.
    vmem_bytes = 4 * (2 * (2 * tm * tk + 2 * tk * tn + 2 * tm * tn + 2 * tn)
                      + 2 * tm * tn)
    vmem_limit = 2 * vmem_bytes  # headroom
    compiler_params = pltpu.CompilerParams(
        dimension_semantics=("parallel", "parallel", "arbitrary"),
        vmem_limit_bytes=int(vmem_limit) if vmem_limit > (16 << 20) else None,
    )

    out_r, out_i = pl.pallas_call(
        _clinear_kernel,
        out_shape=(
            jax.ShapeDtypeStruct((Mp, Np), jnp.float32),
            jax.ShapeDtypeStruct((Mp, Np), jnp.float32),
        ),
        grid_spec=pltpu.PrefetchScalarGridSpec(
            num_scalar_prefetch=0,
            grid=grid,
            in_specs=[
                pl.BlockSpec((tm, tk), lambda i, j, k: (i, k)),   # xr
                pl.BlockSpec((tm, tk), lambda i, j, k: (i, k)),   # xi
                pl.BlockSpec((tk, tn), lambda i, j, k: (k, j)),   # wr
                pl.BlockSpec((tk, tn), lambda i, j, k: (k, j)),   # wi
                pl.BlockSpec((1, tn), lambda i, j, k: (0, j)),    # br
                pl.BlockSpec((1, tn), lambda i, j, k: (0, j)),    # bi
            ],
            out_specs=(
                pl.BlockSpec((tm, tn), lambda i, j, k: (i, j)),
                pl.BlockSpec((tm, tn), lambda i, j, k: (i, j)),
            ),
            scratch_shapes=[
                pltpu.VMEM((tm, tn), jnp.float32),
                pltpu.VMEM((tm, tn), jnp.float32),
            ],
        ),
        compiler_params=compiler_params,
    )(xr_p, xi_p, wr_p, wi_p, br_p, bi_p)

    return out_r[:M, :N], out_i[:M, :N]


def clinear(x, weights, bias):
    """CLinear.forward: cast x to complex64, return x @ weights + bias.

    Convenience wrapper. In a real model, store wr/wi/br/bi as persistent f32
    parameters and call `clinear_planes` directly to avoid re-splitting the
    weight matrix (2x weight HBM traffic) on every forward pass.
    """
    x = x.astype(jnp.complex64)
    weights = weights.astype(jnp.complex64)
    bias = bias.astype(jnp.complex64)

    xr = jnp.real(x).astype(jnp.float32)
    xi = jnp.imag(x).astype(jnp.float32)
    wr = jnp.real(weights).astype(jnp.float32)
    wi = jnp.imag(weights).astype(jnp.float32)
    br = jnp.real(bias).astype(jnp.float32)
    bi = jnp.imag(bias).astype(jnp.float32)

    out_r, out_i = clinear_planes(xr, xi, wr, wi, br, bi)
    return jax.lax.complex(out_r, out_i)


if __name__ == "__main__":
    key = jax.random.PRNGKey(0)

    # Aligned shape (matches module defaults) and an unaligned shape to
    # exercise the padding path.
    for (B, size_in, size_out) in [(8, 32, 128), (5, 48, 200)]:
        key, k_wr, k_wi, k_xr, k_xi = jax.random.split(key, 5)

        # Parameters as in the module: complex64 randn weights, zero bias.
        wr = jax.random.normal(k_wr, (size_in, size_out), dtype=jnp.float32)
        wi = jax.random.normal(k_wi, (size_in, size_out), dtype=jnp.float32)
        weights = jax.lax.complex(wr, wi)
        bias = jnp.zeros((size_out,), dtype=jnp.complex64)

        xr = jax.random.normal(k_xr, (B, size_in), dtype=jnp.float32)
        xi = jax.random.normal(k_xi, (B, size_in), dtype=jnp.float32)

        # Test both the real-input path (forward casts to complex64, imag=0)
        # and a genuinely complex input.
        for x in (xr, jax.lax.complex(xr, xi)):
            y = clinear(x, weights, bias)
            y = jax.block_until_ready(y)

            # High-precision host reference.
            x_np = np.asarray(x).astype(np.complex128)
            w_np = np.asarray(weights).astype(np.complex128)
            b_np = np.asarray(bias).astype(np.complex128)
            y_ref = x_np @ w_np + b_np

            assert y.shape == (B, size_out) and y.dtype == jnp.complex64
            assert np.allclose(np.asarray(y), y_ref, atol=1e-3, rtol=1e-3), (
                f"mismatch for shape {(B, size_in, size_out)}"
            )

    print("KERNEL_OK")
</pallas_src>

<mosaic_0001>
module attributes {stable_mosaic.version = 11 : i64} {
  func.func @_clinear_kernel(%arg0: i32, %arg1: i32, %arg2: i32, %arg3: memref<8x32xf32, #tpu.memory_space<vmem>>, %arg4: memref<8x32xf32, #tpu.memory_space<vmem>>, %arg5: memref<32x128xf32, #tpu.memory_space<vmem>>, %arg6: memref<32x128xf32, #tpu.memory_space<vmem>>, %arg7: memref<1x128xf32, #tpu.memory_space<vmem>>, %arg8: memref<1x128xf32, #tpu.memory_space<vmem>>, %arg9: memref<8x128xf32, #tpu.memory_space<vmem>>, %arg10: memref<8x128xf32, #tpu.memory_space<vmem>>, %arg11: memref<8x128xf32, #tpu.memory_space<vmem>>, %arg12: memref<8x128xf32, #tpu.memory_space<vmem>>) attributes {dimension_semantics = [#tpu.dimension_semantics<parallel>, #tpu.dimension_semantics<parallel>, #tpu.dimension_semantics<arbitrary>], iteration_bounds = array<i64: 1, 1, 1>, scalar_prefetch = 0 : i64, scratch_operands = 2 : i64, tpu.core_type = #tpu.core_type<tc>, window_params = [{transform_indices = @transform_0, window_bounds = array<i64: 8, 32>}, {transform_indices = @transform_1, window_bounds = array<i64: 8, 32>}, {transform_indices = @transform_2, window_bounds = array<i64: 32, 128>}, {transform_indices = @transform_3, window_bounds = array<i64: 32, 128>}, {transform_indices = @transform_4, window_bounds = array<i64: 1, 128>}, {transform_indices = @transform_5, window_bounds = array<i64: 1, 128>}, {transform_indices = @transform_6, window_bounds = array<i64: 8, 128>}, {transform_indices = @transform_7, window_bounds = array<i64: 8, 128>}]} {
    %c0_i32 = arith.constant 0 : i32
    %0 = arith.cmpi eq, %arg2, %c0_i32 : i32
    %1 = arith.extui %0 : i1 to i32
    %c0_i32_0 = arith.constant 0 : i32
    %2 = arith.cmpi ne, %1, %c0_i32_0 : i32
    scf.if %2 {
      %cst_20 = arith.constant 0.000000e+00 : f32
      %24 = vector.broadcast %cst_20 : f32 to vector<8x128xf32>
      %c0_21 = arith.constant 0 : index
      %c0_22 = arith.constant 0 : index
      %25 = vector.load %arg11[%c0_21, %c0_22] : memref<8x128xf32, #tpu.memory_space<vmem>>, vector<8x128xf32>
      tpu.vector_store %arg11[%c0_21, %c0_22], %24 {strides = array<i32>} : memref<8x128xf32, #tpu.memory_space<vmem>>, vector<8x128xf32>,
      %cst_23 = arith.constant 0.000000e+00 : f32
      %26 = vector.broadcast %cst_23 : f32 to vector<8x128xf32>
      %c0_24 = arith.constant 0 : index
      %c0_25 = arith.constant 0 : index
      %27 = vector.load %arg12[%c0_24, %c0_25] : memref<8x128xf32, #tpu.memory_space<vmem>>, vector<8x128xf32>
      tpu.vector_store %arg12[%c0_24, %c0_25], %26 {strides = array<i32>} : memref<8x128xf32, #tpu.memory_space<vmem>>, vector<8x128xf32>,
    } else {
    }
    %c0 = arith.constant 0 : index
    %c0_1 = arith.constant 0 : index
    %3 = vector.load %arg3[%c0, %c0_1] : memref<8x32xf32, #tpu.memory_space<vmem>>, vector<8x32xf32>
    %c0_2 = arith.constant 0 : index
    %c0_3 = arith.constant 0 : index
    %4 = vector.load %arg4[%c0_2, %c0_3] : memref<8x32xf32, #tpu.memory_space<vmem>>, vector<8x32xf32>
    %c0_4 = arith.constant 0 : index
    %c0_5 = arith.constant 0 : index
    %5 = vector.load %arg5[%c0_4, %c0_5] : memref<32x128xf32, #tpu.memory_space<vmem>>, vector<32x128xf32>
    %c0_6 = arith.constant 0 : index
    %c0_7 = arith.constant 0 : index
    %6 = vector.load %arg6[%c0_6, %c0_7] : memref<32x128xf32, #tpu.memory_space<vmem>>, vector<32x128xf32>
    %cst = arith.constant dense<0.000000e+00> : vector<8x128xf32>
    %7 = tpu.matmul %3, %5, %cst {dimension_numbers = #tpu.dot_dimension_numbers<[1], [0], [0], [1], [0, 0, 1, 1], [], []>} : vector<8x32xf32>, vector<32x128xf32>, vector<8x128xf32> -> vector<8x128xf32>
    %cst_8 = arith.constant dense<0.000000e+00> : vector<8x128xf32>
    %8 = tpu.matmul %4, %6, %cst_8 {dimension_numbers = #tpu.dot_dimension_numbers<[1], [0], [0], [1], [0, 0, 1, 1], [], []>} : vector<8x32xf32>, vector<32x128xf32>, vector<8x128xf32> -> vector<8x128xf32>
    %9 = arith.addf %3, %4 : vector<8x32xf32>
    %10 = arith.addf %5, %6 : vector<32x128xf32>
    %cst_9 = arith.constant dense<0.000000e+00> : vector<8x128xf32>
    %11 = tpu.matmul %9, %10, %cst_9 {dimension_numbers = #tpu.dot_dimension_numbers<[1], [0], [0], [1], [0, 0, 1, 1], [], []>} : vector<8x32xf32>, vector<32x128xf32>, vector<8x128xf32> -> vector<8x128xf32>
    %c0_10 = arith.constant 0 : index
    %c0_11 = arith.constant 0 : index
    %12 = vector.load %arg11[%c0_10, %c0_11] : memref<8x128xf32, #tpu.memory_space<vmem>>, vector<8x128xf32>
    %13 = arith.subf %7, %8 : vector<8x128xf32>
    %14 = arith.addf %12, %13 : vector<8x128xf32>
    %c0_12 = arith.constant 0 : index
    %c0_13 = arith.constant 0 : index
    %15 = vector.load %arg11[%c0_12, %c0_13] : memref<8x128xf32, #tpu.memory_space<vmem>>, vector<8x128xf32>
    tpu.vector_store %arg11[%c0_12, %c0_13], %14 {strides = array<i32>} : memref<8x128xf32, #tpu.memory_space<vmem>>, vector<8x128xf32>,
    %c0_14 = arith.constant 0 : index
    %c0_15 = arith.constant 0 : index
    %16 = vector.load %arg12[%c0_14, %c0_15] : memref<8x128xf32, #tpu.memory_space<vmem>>, vector<8x128xf32>
    %17 = arith.subf %11, %7 : vector<8x128xf32>
    %18 = arith.subf %17, %8 : vector<8x128xf32>
    %19 = arith.addf %16, %18 : vector<8x128xf32>
    %c0_16 = arith.constant 0 : index
    %c0_17 = arith.constant 0 : index
    %20 = vector.load %arg12[%c0_16, %c0_17] : memref<8x128xf32, #tpu.memory_space<vmem>>, vector<8x128xf32>
    tpu.vector_store %arg12[%c0_16, %c0_17], %19 {strides = array<i32>} : memref<8x128xf32, #tpu.memory_space<vmem>>, vector<8x128xf32>,
    %c0_i32_18 = arith.constant 0 : i32
    %21 = arith.cmpi eq, %arg2, %c0_i32_18 : i32
    %22 = arith.extui %21 : i1 to i32
    %c0_i32_19 = arith.constant 0 : i32
    %23 = arith.cmpi ne, %22, %c0_i32_19 : i32
    scf.if %23 {
      %c0_20 = arith.constant 0 : index
      %c0_21 = arith.constant 0 : index
      %24 = vector.load %arg11[%c0_20, %c0_21] : memref<8x128xf32, #tpu.memory_space<vmem>>, vector<8x128xf32>
      %c0_22 = arith.constant 0 : index
      %c0_23 = arith.constant 0 : index
      %25 = vector.load %arg7[%c0_22, %c0_23] : memref<1x128xf32, #tpu.memory_space<vmem>>, vector<1x128xf32>
      %26 = vector.broadcast %25 : vector<1x128xf32> to vector<8x128xf32>
      %27 = arith.addf %24, %26 : vector<8x128xf32>
      %c0_24 = arith.constant 0 : index
      %c0_25 = arith.constant 0 : index
      %28 = vector.load %arg9[%c0_24, %c0_25] : memref<8x128xf32, #tpu.memory_space<vmem>>, vector<8x128xf32>
      tpu.vector_store %arg9[%c0_24, %c0_25], %27 {strides = array<i32>} : memref<8x128xf32, #tpu.memory_space<vmem>>, vector<8x128xf32>,
      %c0_26 = arith.constant 0 : index
      %c0_27 = arith.constant 0 : index
      %29 = vector.load %arg12[%c0_26, %c0_27] : memref<8x128xf32, #tpu.memory_space<vmem>>, vector<8x128xf32>
      %c0_28 = arith.constant 0 : index
      %c0_29 = arith.constant 0 : index
      %30 = vector.load %arg8[%c0_28, %c0_29] : memref<1x128xf32, #tpu.memory_space<vmem>>, vector<1x128xf32>
      %31 = vector.broadcast %30 : vector<1x128xf32> to vector<8x128xf32>
      %32 = arith.addf %29, %31 : vector<8x128xf32>
      %c0_30 = arith.constant 0 : index
      %c0_31 = arith.constant 0 : index
      %33 = vector.load %arg10[%c0_30, %c0_31] : memref<8x128xf32, #tpu.memory_space<vmem>>, vector<8x128xf32>
      tpu.vector_store %arg10[%c0_30, %c0_31], %32 {strides = array<i32>} : memref<8x128xf32, #tpu.memory_space<vmem>>, vector<8x128xf32>,
    } else {
    }
    return
  }
  func.func @transform_0(%arg0: i32, %arg1: i32, %arg2: i32) -> (i32, i32) {
    %c0_i32 = arith.constant 0 : i32
    return %arg0, %arg2 : i32, i32
  }
  func.func @transform_1(%arg0: i32, %arg1: i32, %arg2: i32) -> (i32, i32) {
    %c0_i32 = arith.constant 0 : i32
    return %arg0, %arg2 : i32, i32
  }
  func.func @transform_2(%arg0: i32, %arg1: i32, %arg2: i32) -> (i32, i32) {
    %c0_i32 = arith.constant 0 : i32
    return %arg2, %arg1 : i32, i32
  }
  func.func @transform_3(%arg0: i32, %arg1: i32, %arg2: i32) -> (i32, i32) {
    %c0_i32 = arith.constant 0 : i32
    return %arg2, %arg1 : i32, i32
  }
  func.func @transform_4(%arg0: i32, %arg1: i32, %arg2: i32) -> (i32, i32) {
    %c0_i32 = arith.constant 0 : i32
    %c0_i32_0 = arith.constant 0 : i32
    return %c0_i32, %arg1 : i32, i32
  }
  func.func @transform_5(%arg0: i32, %arg1: i32, %arg2: i32) -> (i32, i32) {
    %c0_i32 = arith.constant 0 : i32
    %c0_i32_0 = arith.constant 0 : i32
    return %c0_i32, %arg1 : i32, i32
  }
  func.func @transform_6(%arg0: i32, %arg1: i32, %arg2: i32) -> (i32, i32) {
    %c0_i32 = arith.constant 0 : i32
    return %arg0, %arg1 : i32, i32
  }
  func.func @transform_7(%arg0: i32, %arg1: i32, %arg2: i32) -> (i32, i32) {
    %c0_i32 = arith.constant 0 : i32
    return %arg0, %arg1 : i32, i32
  }
}

</mosaic_0001>

<llo_original>
// kernel: clinear_planes.1
$region0: #{clinear_planes.1}
  #allocation0 [shape = 'u32[]', space=smem, size = 0x4, offset = 0x4, fixed_abs, tag = 'smem constant byte address 0x4 - core index']
  #allocation1 [shape = 'u32[72,128]{1,0:T(1,128)}', space=vmem, size = 0x9000, scoped, tag = 'internal scratch']
  #allocation2 [shape = 'f32[8,128]{1,0:T(8,128)}', space=vmem, size = 0x1000, scoped, tag = 'scratch operand']
  #allocation3 [shape = 'f32[8,128]{1,0:T(8,128)}', space=vmem, size = 0x1000, scoped, tag = 'scratch operand']
  %s0 = inlined_call_operand.hbm [shape: f32[8,32], index: 0, kind: input, shape index: {}]
  %s1 = inlined_call_operand.hbm [shape: f32[8,32], index: 1, kind: input, shape index: {}]
  %s2 = inlined_call_operand.hbm [shape: f32[32,128], index: 2, kind: input, shape index: {}]
  %s3 = inlined_call_operand.hbm [shape: f32[32,128], index: 3, kind: input, shape index: {}]
  %s4 = inlined_call_operand.vmem [shape: f32[1,128], index: 4, kind: input, shape index: {}]
  %s5 = inlined_call_operand.vmem [shape: f32[1,128], index: 5, kind: input, shape index: {}]
  %s6 = inlined_call_operand.hbm [shape: f32[8,128], index: 6, kind: output, shape index: {0}]
  %s7 = inlined_call_operand.hbm [shape: f32[8,128], index: 7, kind: output, shape index: {1}]
  %8 = xla_tuple %s6, %s7
  %s9 = sld [smem:[#allocation0]]
  $region66: #{clinear_planes.1} parent=0
    _
  %s11 = ssub.s32 1, %s9
  %s12 = scalar_select 0, %s11, %s9
  $region1: #{clinear_planes.1} parent=0
    #allocation4 [shape = 'u8[4096]{0}', space=vmem, size = 0x1000, scoped, tag = 'input window, operand 0, single buffered']
    #allocation5 [shape = 's32[1]{0}', space=sflag, size = 0x4, scoped, tag = 'scoped memory for clinear_planes.1']
    #allocation6 [shape = 's32[1]{0}', space=sflag, size = 0x4, scoped, tag = 'scoped memory for clinear_planes.1']
    #allocation7 [shape = 'u8[4096]{0}', space=vmem, size = 0x1000, scoped, tag = 'input window, operand 1, single buffered']
    #allocation8 [shape = 's32[1]{0}', space=sflag, size = 0x4, scoped, tag = 'scoped memory for clinear_planes.1']
    #allocation9 [shape = 'u8[16384]{0}', space=vmem, size = 0x4000, scoped, tag = 'input window, operand 2, single buffered']
    #allocation10 [shape = 'u8[16384]{0}', space=vmem, size = 0x4000, scoped, tag = 'input window, operand 3, single buffered']
    #allocation11 [shape = 's32[1]{0}', space=sflag, size = 0x4, scoped, tag = 'scoped memory for clinear_planes.1']
    #allocation12 [shape = 'u8[4096]{0}', space=vmem, size = 0x1000, scoped, tag = 'output window, operand 0, single buffered']
    #allocation13 [shape = 'u8[4096]{0}', space=vmem, size = 0x1000, scoped, tag = 'output window, operand 1, single buffered']
    #allocation14 [shape = 's32[1]{0}', space=sflag, size = 0x4, scoped, tag = 'scoped memory for clinear_planes.1']
    %13 = vsyncpa [#allocation5], 0
    %14 = vsyncpa [#allocation8], 0
    %15 = vsyncpa [#allocation11], 0
    %16 = vsyncpa [#allocation6], 0
    %17 = vsyncpa [#allocation14], 0
    // Predicated region
    $region2: #{clinear_planes.1} parent=1 // pred_check
      _
    $region3: #{clinear_planes.1} parent=1 // pred_check_branch
      %19 = sbr.rel (0) target = $region5
    $region4: #{clinear_planes.1} parent=1 // pred_region
      %21 = vsyncadd [#allocation5], 0
      %s23 = sshll.u32 %s0, 4
      %s24 = int_to_ptr.hbm [resolvable:$true] %s23
      %s25 = sshll.u32 [#allocation4], 4
      %s26 = int_to_ptr.vmem [resolvable:$true] %s25
      %28 = dma.hbm_to_vmem [thread:$0]  %s24, 128, %s26, [#allocation5]
    $region5: #{clinear_planes.1} parent=1 // pred_fallthru
      _
    // Predicated region
    $region6: #{clinear_planes.1} parent=1 // pred_check
      _
    $region7: #{clinear_planes.1} parent=1 // pred_check_branch
      %30 = sbr.rel (0) target = $region9
    $region8: #{clinear_planes.1} parent=1 // pred_region
      %32 = vsyncadd [#allocation8], 0
      %s34 = sshll.u32 %s1, 4
      %s35 = int_to_ptr.hbm [resolvable:$true] %s34
      %s36 = sshll.u32 [#allocation7], 4
      %s37 = int_to_ptr.vmem [resolvable:$true] %s36
      %39 = dma.hbm_to_vmem [thread:$0]  %s35, 128, %s37, [#allocation8]
    $region9: #{clinear_planes.1} parent=1 // pred_fallthru
      _
    // Predicated region
    $region10: #{clinear_planes.1} parent=1 // pred_check
      _
    $region11: #{clinear_planes.1} parent=1 // pred_check_branch
      %41 = sbr.rel (0) target = $region13
    $region12: #{clinear_planes.1} parent=1 // pred_region
      %43 = vsyncadd [#allocation8], 0
      %s44 = sshll.u32 %s2, 4
      %s45 = int_to_ptr.hbm [resolvable:$true] %s44
      %s46 = sshll.u32 [#allocation9], 4
      %s47 = int_to_ptr.vmem [resolvable:$true] %s46
      %52 = dma.hbm_to_vmem [thread:$0]  %s45, 512, %s47, [#allocation8], 128, 128, 8
    $region13: #{clinear_planes.1} parent=1 // pred_fallthru
      _
    // Predicated region
    $region14: #{clinear_planes.1} parent=1 // pred_check
      _
    $region15: #{clinear_planes.1} parent=1 // pred_check_branch
      %54 = sbr.rel (0) target = $region17
    $region16: #{clinear_planes.1} parent=1 // pred_region
      %56 = vsyncadd [#allocation11], 0
      %s57 = sshll.u32 %s3, 4
      %s58 = int_to_ptr.hbm [resolvable:$true] %s57
      %s59 = sshll.u32 [#allocation10], 4
      %s60 = int_to_ptr.vmem [resolvable:$true] %s59
      %65 = dma.hbm_to_vmem [thread:$0]  %s58, 512, %s60, [#allocation11], 128, 128, 8
    $region17: #{clinear_planes.1} parent=1 // pred_fallthru
      _
    // Predicated region
    $region18: #{clinear_planes.1} parent=1 // pred_check
      _
    $region19: #{clinear_planes.1} parent=1 // pred_check_branch
      %67 = sbr.rel (0) target = $region21
    $region20: #{clinear_planes.1} parent=1 // pred_region
      _
    $region21: #{clinear_planes.1} parent=1 // pred_fallthru
      _
    // Predicated region
    $region22: #{clinear_planes.1} parent=1 // pred_check
      _
    $region23: #{clinear_planes.1} parent=1 // pred_check_branch
      %69 = sbr.rel (0) target = $region25
    $region24: #{clinear_planes.1} parent=1 // pred_region
      _
    $region25: #{clinear_planes.1} parent=1 // pred_fallthru
      _
    // Predicated region
    $region26: #{clinear_planes.1} parent=1 // pred_check
      _
    $region27: #{clinear_planes.1} parent=1 // pred_check_branch
      %71 = sbr.rel (0) target = $region29
    $region28: #{clinear_planes.1} parent=1 // pred_region
      %73 = dma.done [#allocation5], 128
    $region29: #{clinear_planes.1} parent=1 // pred_fallthru
      _
    // Predicated region
    $region30: #{clinear_planes.1} parent=1 // pred_check
      _
    $region31: #{clinear_planes.1} parent=1 // pred_check_branch
      %75 = sbr.rel (0) target = $region33
    $region32: #{clinear_planes.1} parent=1 // pred_region
      %77 = dma.done [#allocation8], 128
    $region33: #{clinear_planes.1} parent=1 // pred_fallthru
      _
    // Predicated region
    $region34: #{clinear_planes.1} parent=1 // pred_check
      _
    $region35: #{clinear_planes.1} parent=1 // pred_check_branch
      %79 = sbr.rel (0) target = $region37
    $region36: #{clinear_planes.1} parent=1 // pred_region
      %81 = dma.done [#allocation8], 512
    $region37: #{clinear_planes.1} parent=1 // pred_fallthru
      _
    // Predicated region
    $region38: #{clinear_planes.1} parent=1 // pred_check
      _
    $region39: #{clinear_planes.1} parent=1 // pred_check_branch
      %83 = sbr.rel (0) target = $region41
    $region40: #{clinear_planes.1} parent=1 // pred_region
      %85 = dma.done [#allocation11], 512
    $region41: #{clinear_planes.1} parent=1 // pred_fallthru
      _
    %p86 = scmp.eq.s32.totalorder 0, 0
    // Predicated region
    $region42: #{clinear_planes.1} parent=1 // pred_check
      %p87 = pneg %p86
    $region43: #{clinear_planes.1} parent=1 // pred_check_branch
      %89 = sbr.rel (%p87) target = $region45
    $region44: #{clinear_planes.1} parent=1 // pred_region
      %90 = vst [vmem:[#allocation2] sm:$0xff] 0.0
      %91 = vst [vmem:[#allocation3] sm:$0xff] 0.0
    $region45: #{clinear_planes.1} parent=1 // pred_fallthru
      _
    %v92 = vld [vmem:[#allocation4] sm:$0xff]
    %v93 = vld [vmem:[#allocation7] sm:$0xff]
    %v94 = vld [vmem:[#allocation9] sm:$0xff]
    %v95 = vld [vmem:[#allocation9 + $0x8] sm:$0xff]
    %v96 = vld [vmem:[#allocation9 + $0x10] sm:$0xff]
    %v97 = vld [vmem:[#allocation9 + $0x18] sm:$0xff]
    %v98 = vld [vmem:[#allocation10] sm:$0xff]
    %v99 = vld [vmem:[#allocation10 + $0x8] sm:$0xff]
    %v100 = vld [vmem:[#allocation10 + $0x10] sm:$0xff]
    %v101 = vld [vmem:[#allocation10 + $0x18] sm:$0xff]
    %vm102 = vcmask 261120
    %v104 = vsel %vm102, %v92, 0
    %106 = vmatpush.msra.mxu0 0.0
    %107 = vmatpush.msra.mxu0 0.0
    %108 = vmatpush.msra.mxu0 0.0
    %109 = vmatpush.msra.mxu0 0.0
    %110 = vmatpush.msra.mxu0 0.0
    %111 = vmatpush.msra.mxu0 0.0
    %112 = vmatpush.msra.mxu0 0.0
    %113 = vmatpush.msra.mxu0 0.0
    %114 = vmatpush.msra.mxu0 0.0
    %115 = vmatpush.msra.mxu0 0.0
    %116 = vmatpush.msra.mxu0 0.0
    %117 = vmatpush.msra.mxu0 0.0
    %118 = vmatpush.msra.mxu0 %v97
    %119 = vmatpush.msra.mxu0 %v96
    %120 = vmatpush.msra.mxu0 %v95
    %121 = vmatpush.msra.mxu0 %v94
    %122 = vmatmul.f32.gmra.mxu0 %v104
    %v123 = vpop.f32.mrf.mxu0
    %v124 = vadd.f32 0.0, %v123
    %125 = vdwg.mxu0
    %v127 = vsel %vm102, %v93, 0
    %129 = vmatpush.msra.mxu0 0.0
    %130 = vmatpush.msra.mxu0 0.0
    %131 = vmatpush.msra.mxu0 0.0
    %132 = vmatpush.msra.mxu0 0.0
    %133 = vmatpush.msra.mxu0 0.0
    %134 = vmatpush.msra.mxu0 0.0
    %135 = vmatpush.msra.mxu0 0.0
    %136 = vmatpush.msra.mxu0 0.0
    %137 = vmatpush.msra.mxu0 0.0
    %138 = vmatpush.msra.mxu0 0.0
    %139 = vmatpush.msra.mxu0 0.0
    %140 = vmatpush.msra.mxu0 0.0
    %141 = vmatpush.msra.mxu0 %v101
    %142 = vmatpush.msra.mxu0 %v100
    %143 = vmatpush.msra.mxu0 %v99
    %144 = vmatpush.msra.mxu0 %v98
    %145 = vmatmul.f32.gmra.mxu0 %v127
    %v146 = vpop.f32.mrf.mxu0
    %v147 = vadd.f32 0.0, %v146
    %148 = vdwg.mxu0
    %v149 = vadd.f32 %v92, %v93
    %v150 = vadd.f32 %v94, %v98
    %v151 = vadd.f32 %v95, %v99
    %v152 = vadd.f32 %v96, %v100
    %v153 = vadd.f32 %v97, %v101
    %v155 = vsel %vm102, %v149, 0
    %157 = vmatpush.msra.mxu0 0.0
    %158 = vmatpush.msra.mxu0 0.0
    %159 = vmatpush.msra.mxu0 0.0
    %160 = vmatpush.msra.mxu0 0.0
    %161 = vmatpush.msra.mxu0 0.0
    %162 = vmatpush.msra.mxu0 0.0
    %163 = vmatpush.msra.mxu0 0.0
    %164 = vmatpush.msra.mxu0 0.0
    %165 = vmatpush.msra.mxu0 0.0
    %166 = vmatpush.msra.mxu0 0.0
    %167 = vmatpush.msra.mxu0 0.0
    %168 = vmatpush.msra.mxu0 0.0
    %169 = vmatpush.msra.mxu0 %v153
    %170 = vmatpush.msra.mxu0 %v152
    %171 = vmatpush.msra.mxu0 %v151
    %172 = vmatpush.msra.mxu0 %v150
    %173 = vmatmul.f32.gmra.mxu0 %v155
    %v174 = vpop.f32.mrf.mxu0
    %v175 = vadd.f32 0.0, %v174
    %176 = vdwg.mxu0
    %v177 = vld [vmem:[#allocation2] sm:$0xff]
    %v178 = vsub.f32 %v124, %v147
    %v179 = vadd.f32 %v177, %v178
    %180 = vst [vmem:[#allocation2] sm:$0xff] %v179
    %v181 = vld [vmem:[#allocation3] sm:$0xff]
    %v182 = vsub.f32 %v175, %v124
    %v183 = vsub.f32 %v182, %v147
    %v184 = vadd.f32 %v181, %v183
    %185 = vst [vmem:[#allocation3] sm:$0xff] %v184
    // Predicated region
    $region46: #{clinear_planes.1} parent=1 // pred_check
      %p186 = pneg %p86
    $region47: #{clinear_planes.1} parent=1 // pred_check_branch
      %188 = sbr.rel (%p186) target = $region49
    $region48: #{clinear_planes.1} parent=1 // pred_region
      %v189 = vld [vmem:[#allocation2] sm:$0xff]
      %v190 = vld [vmem:[%s4] sm:$0x1]
      %v192 = vperm.slane %v190, 0
      %v194 = vadd.f32 %v189, %v192
      %195 = vst [vmem:[#allocation12] sm:$0xff] %v194
      %v196 = vld [vmem:[#allocation3] sm:$0xff]
      %v197 = vld [vmem:[%s5] sm:$0x1]
      %v199 = vperm.slane %v197, 0
      %v201 = vadd.f32 %v196, %v199
      %202 = vst [vmem:[#allocation13] sm:$0xff] %v201
    $region49: #{clinear_planes.1} parent=1 // pred_fallthru
      _
    // Predicated region
    $region50: #{clinear_planes.1} parent=1 // pred_check
      _
    $region51: #{clinear_planes.1} parent=1 // pred_check_branch
      %204 = sbr.rel (0) target = $region53
    $region52: #{clinear_planes.1} parent=1 // pred_region
      %206 = vsyncadd [#allocation6], 0
      %s208 = sshll.u32 [#allocation12], 4
      %s209 = int_to_ptr.vmem [resolvable:$true] %s208
      %s210 = sshll.u32 %s6, 4
      %s211 = int_to_ptr.hbm [resolvable:$true] %s210
      %213 = dma.vmem_to_hbm [thread:$0]  %s209, 128, %s211, [#allocation6]
    $region53: #{clinear_planes.1} parent=1 // pred_fallthru
      _
    // Predicated region
    $region54: #{clinear_planes.1} parent=1 // pred_check
      _
    $region55: #{clinear_planes.1} parent=1 // pred_check_branch
      %215 = sbr.rel (0) target = $region57
    $region56: #{clinear_planes.1} parent=1 // pred_region
      %217 = vsyncadd [#allocation14], 0
      %s219 = sshll.u32 [#allocation13], 4
      %s220 = int_to_ptr.vmem [resolvable:$true] %s219
      %s221 = sshll.u32 %s7, 4
      %s222 = int_to_ptr.hbm [resolvable:$true] %s221
      %224 = dma.vmem_to_hbm [thread:$0]  %s220, 128, %s222, [#allocation14]
    $region57: #{clinear_planes.1} parent=1 // pred_fallthru
      _
    // Predicated region
    $region58: #{clinear_planes.1} parent=1 // pred_check
      _
    $region59: #{clinear_planes.1} parent=1 // pred_check_branch
      %226 = sbr.rel (0) target = $region61
    $region60: #{clinear_planes.1} parent=1 // pred_region
      %228 = dma.done [#allocation6], 128
    $region61: #{clinear_planes.1} parent=1 // pred_fallthru
      _
    // Predicated region
    $region62: #{clinear_planes.1} parent=1 // pred_check
      _
    $region63: #{clinear_planes.1} parent=1 // pred_check_branch
      %230 = sbr.rel (0) target = $region65
    $region64: #{clinear_planes.1} parent=1 // pred_region
      %232 = dma.done [#allocation14], 128
    $region65: #{clinear_planes.1} parent=1 // pred_fallthru
      _
    %233 = vsyncpa [#allocation5], 1
    %234 = vsyncpa [#allocation8], 1
    %235 = vsyncpa [#allocation11], 1
    %236 = vsyncpa [#allocation6], 1
    %237 = vsyncpa [#allocation14], 1

</llo_original>
